<compile_context>
chip_gen: v6e
topology: v6e:2x2x1
jax: 0.10.0
libtpu: 0.0.40
codegen_flags: <defaults>
</compile_context>

<pallas_src>
import functools

import jax
import jax.numpy as jnp
from jax import lax
from jax.experimental import pallas as pl
from jax.experimental.pallas import tpu as pltpu

_LANE = 128
_VMEM_LIMIT_BYTES = 48 << 20      # < v7x's 64 MiB physical VMEM; fine on v5e/v6e too
_DEFAULT_TILE_BUDGET = 40 << 20   # tile-selection budget (headroom under the limit above)


def _round_up(x, m):
    return (x + m - 1) // m * m


def _largest_tile(dim, target, quantum):
    """Largest multiple of `quantum` <= target that divides `dim` (requires dim % quantum == 0)."""
    t = min(max(target, quantum) // quantum * quantum, dim)
    while t >= quantum:
        if dim % t == 0:
            return t
        t -= quantum
    return dim


def _query_kernel_resident(x_ref, w_ref, b_ref, o_ref, *, scale):
    # x_ref: (tm, D) rows of the flattened [B*S, D] input (streamed)
    # w_ref: (D, D)  full nn.Linear weight, [out, in] layout, VMEM-resident across the grid
    # b_ref: (1, D)  f32 bias
    # o_ref: (tm, D) output tile
    y = lax.dot_general(x_ref[...], w_ref[...],
                        dimension_numbers=(((1,), (1,)), ((), ())),
                        preferred_element_type=jnp.float32)
    o_ref[...] = ((y + b_ref[...]) * scale).astype(o_ref.dtype)


def _query_kernel_tiled(x_ref, w_ref, b_ref, o_ref, *acc, scale):
    # Accumulate directly into o_ref when it is f32 (no scratch passed); otherwise into an
    # f32 VMEM scratch.  Either way the block is resident across the (innermost) K grid axis.
    acc_ref = acc[0] if acc else o_ref
    k = pl.program_id(2)

    @pl.when(k == 0)
    def _():
        acc_ref[...] = jnp.zeros_like(acc_ref)

    # y[m, n] = sum_k x[m, k] * W[n, k]  == x @ W^T (NT contraction on the MXU).
    # TODO(synk): if a bundle dump shows a per-tile vxpose for the (tn, tk) weight tile,
    # pre-transpose the weight to [in, out] once at parameter-load time instead.
    acc_ref[...] += lax.dot_general(x_ref[...], w_ref[...],
                                    dimension_numbers=(((1,), (1,)), ((), ())),
                                    preferred_element_type=jnp.float32)

    @pl.when(k == pl.num_programs(2) - 1)
    def _():
        o_ref[...] = ((acc_ref[...] + b_ref[...]) * scale).astype(o_ref.dtype)


def query_module_forward(x, weight, bias, heads, *, compute_dtype=None,
                         tile_budget_bytes=_DEFAULT_TILE_BUDGET):
    """Pallas-TPU forward of QueryModule.

    x: [B, S, D]; weight: [D, D] (nn.Linear [out, in] layout); bias: [D].
    Returns q: [B, heads, S, head_dim], matching the PyTorch module.

    compute_dtype: optional matmul operand dtype (e.g. jnp.bfloat16).  The MXU is bf16-native
    on v5e/v6e/v7x; accumulation stays f32 and the bias/scale epilogue is f32.  The output
    keeps x.dtype.
    """
    B, S, D = x.shape
    assert D % heads == 0, f"dims ({D}) must be divisible by heads ({heads})"
    head_dim = D // heads
    scale = float(head_dim) ** (-0.25)   # Python-static constant, closed over in the kernel

    out_dtype = x.dtype
    in_dtype = jnp.dtype(compute_dtype) if compute_dtype is not None else jnp.dtype(x.dtype)
    in_bytes = in_dtype.itemsize
    out_bytes = jnp.dtype(out_dtype).itemsize
    sub = 16 if in_bytes <= 2 else 8      # bf16 packs two rows per sublane

    M = B * S
    x2 = x.reshape(M, D).astype(in_dtype)
    w = weight.astype(in_dtype)
    b2 = bias.reshape(1, D).astype(jnp.float32)

    # ---------------- plan selection (sized for v7x's 64 MiB VMEM) ----------------
    # Weight-resident plan: the whole [D, D] weight stays in VMEM (budgeted double-buffered),
    # x/out stream exactly once, no K axis and no accumulator.
    res_fixed = 2 * D * D * in_bytes + 2 * D * 4
    res_per_row = D * (2 * in_bytes + 2 * out_bytes)
    tm_res = max(0, (tile_budget_bytes - res_fixed) // res_per_row) // sub * sub
    min_rows = min(_round_up(M, sub), 128)

    if tm_res >= min_rows:
        mode = "resident"
        Dw = D
        tm = min(tm_res, 2048 if in_bytes <= 2 else 1024, _round_up(M, sub))
    else:
        mode = "tiled"
        # K/N tiles must be 128-multiples (lane-dense stores, bounded VMEM); pad D once if needed.
        Dw = D if D % _LANE == 0 else _round_up(D, _LANE)
        if Dw != D:
            x2 = jnp.pad(x2, ((0, 0), (0, Dw - D)))
            w = jnp.pad(w, ((0, Dw - D), (0, Dw - D)))
            b2 = jnp.pad(b2, ((0, 0), (0, Dw - D)))
        use_acc = jnp.dtype(out_dtype) != jnp.float32   # f32 output accumulates in-place
        tn = _largest_tile(Dw, 512, _LANE)
        tk = _largest_tile(Dw, 512, _LANE)
        fixed = 2 * tn * tk * in_bytes + 2 * tn * 4
        per_row = 2 * tk * in_bytes + 2 * tn * out_bytes + (tn * 4 if use_acc else 0)
        tm_max = max(sub, (tile_budget_bytes - fixed) // per_row)
        tm = min(2048 if in_bytes <= 2 else 1024, tm_max, _round_up(M, sub))
        tm = max(sub, tm // sub * sub)

    # Megacore (v7x has 2 TensorCores): make sure the parallel M axis has >= 2 tiles
    # whenever M is large enough to split.
    if tm >= M and M > sub:
        tm = _round_up(-(-M // 2), sub)

    grid_m = pl.cdiv(M, tm)   # no wrapper-side pad of x: Pallas clips the partial last M block

    common = dict(
        out_shape=jax.ShapeDtypeStruct((M, Dw), out_dtype),
        compiler_params=pltpu.CompilerParams(
            dimension_semantics=(("parallel",) if mode == "resident"
                                 else ("parallel", "parallel", "arbitrary")),
            vmem_limit_bytes=_VMEM_LIMIT_BYTES),
    )

    if mode == "resident":
        q2 = pl.pallas_call(
            functools.partial(_query_kernel_resident, scale=scale),
            grid_spec=pltpu.PrefetchScalarGridSpec(
                num_scalar_prefetch=0,
                grid=(grid_m,),
                in_specs=[
                    pl.BlockSpec((tm, Dw), lambda i: (i, 0)),    # x rows (streamed)
                    pl.BlockSpec((Dw, Dw), lambda i: (0, 0)),    # weight (VMEM-resident)
                    pl.BlockSpec((1, Dw), lambda i: (0, 0)),     # bias
                ],
                out_specs=pl.BlockSpec((tm, Dw), lambda i: (i, 0)),
            ),
            **common,
        )(x2, w, b2)
    else:
        scratch = [pltpu.VMEM((tm, tn), jnp.float32)] if use_acc else []
        q2 = pl.pallas_call(
            functools.partial(_query_kernel_tiled, scale=scale),
            grid_spec=pltpu.PrefetchScalarGridSpec(
                num_scalar_prefetch=0,
                grid=(grid_m, Dw // tn, Dw // tk),
                in_specs=[
                    pl.BlockSpec((tm, tk), lambda i, j, k: (i, k)),   # x rows
                    pl.BlockSpec((tn, tk), lambda i, j, k: (j, k)),   # weight [out, in]
                    pl.BlockSpec((1, tn), lambda i, j, k: (0, j)),    # bias
                ],
                out_specs=pl.BlockSpec((tm, tn), lambda i, j, k: (i, j)),
                scratch_shapes=scratch,
            ),
            **common,
        )(x2, w, b2)

    if Dw != D:
        q2 = q2[:, :D]
    # Head split/permute glue: [B*S, D] -> [B, heads, S, head_dim]
    # (matches .view(B, S, H, Hd).permute(0, 2, 1, 3) in the PyTorch module).
    # TODO(synk): when head_dim >= 128, fuse this permute into out_specs (lane-dense,
    # head-major output blocks); at head_dim < 128 the fused store would be lane-sparse.
    return q2.reshape(B, S, heads, head_dim).transpose(0, 2, 1, 3)


def reference_forward(x, weight, bias, heads):
    B, S, D = x.shape
    head_dim = D // heads
    q = jnp.einsum("bsd,od->bso", x.astype(jnp.float32), weight.astype(jnp.float32)) + bias
    q = q.reshape(B, S, heads, head_dim).transpose(0, 2, 1, 3)
    return q * (head_dim ** (-0.25))


if __name__ == "__main__":
    # Module config (toy shapes for the demo).
    dims, heads = 32, 4
    B, S = 2, 8

    key = jax.random.PRNGKey(0)
    kx, kw = jax.random.split(key)

    # Deterministic parameter init mirroring init_weights(): weight ~ N(0, 0.02), bias = 0
    weight = 0.02 * jax.random.normal(kw, (dims, dims), dtype=jnp.float32)  # [out, in]
    bias = jnp.zeros((dims,), dtype=jnp.float32)
    x = jax.random.normal(kx, (B, S, dims), dtype=jnp.float32)
    ref = reference_forward(x, weight, bias, heads)

    # 1) weight-resident f32 plan (default at these shapes)
    out = jax.block_until_ready(query_module_forward(x, weight, bias, heads))
    assert out.shape == (B, heads, S, dims // heads), out.shape
    assert jnp.allclose(out, ref, atol=1e-5, rtol=1e-5), float(jnp.max(jnp.abs(out - ref)))

    # 2) K/N-tiled f32 plan (in-place accumulation in the output block; forced by a tiny budget)
    out_t = jax.block_until_ready(
        query_module_forward(x, weight, bias, heads, tile_budget_bytes=1 << 12))
    assert jnp.allclose(out_t, ref, atol=1e-5, rtol=1e-5)

    # 3) bf16 operands (MXU-native, f32 accumulation/epilogue): resident and tiled plans
    out_bf = jax.block_until_ready(
        query_module_forward(x, weight, bias, heads, compute_dtype=jnp.bfloat16))
    assert jnp.allclose(out_bf, ref, atol=5e-2, rtol=5e-2)
    out_bf_t = jax.block_until_ready(
        query_module_forward(x.astype(jnp.bfloat16), weight.astype(jnp.bfloat16),
                             bias, heads, tile_budget_bytes=1 << 12))
    assert jnp.allclose(out_bf_t.astype(jnp.float32), ref, atol=5e-2, rtol=5e-2)

    # 4) partial last row block (M not a multiple of tm; no wrapper-side jnp.pad)
    x_odd = jax.random.normal(jax.random.PRNGKey(1), (B, S + 1, dims), dtype=jnp.float32)
    out_odd = jax.block_until_ready(query_module_forward(x_odd, weight, bias, heads))
    assert jnp.allclose(out_odd, reference_forward(x_odd, weight, bias, heads),
                        atol=1e-5, rtol=1e-5)

    print("KERNEL_OK")
</pallas_src>

<mosaic_0001>
module attributes {stable_mosaic.version = 11 : i64} {
  func.func @_query_kernel_resident(%arg0: i32, %arg1: memref<8x32xf32, #tpu.memory_space<vmem>>, %arg2: memref<32x32xf32, #tpu.memory_space<vmem>>, %arg3: memref<1x32xf32, #tpu.memory_space<vmem>>, %arg4: memref<8x32xf32, #tpu.memory_space<vmem>>) attributes {dimension_semantics = [#tpu.dimension_semantics<parallel>], iteration_bounds = array<i64: 2>, scalar_prefetch = 0 : i64, scratch_operands = 0 : i64, tpu.core_type = #tpu.core_type<tc>, window_params = [{transform_indices = @transform_0, window_bounds = array<i64: 8, 32>}, {pipeline_mode = #tpu.pipeline_mode<synchronous>, transform_indices = @transform_1, window_bounds = array<i64: 32, 32>}, {pipeline_mode = #tpu.pipeline_mode<synchronous>, transform_indices = @transform_2, window_bounds = array<i64: 1, 32>}, {transform_indices = @transform_3, window_bounds = array<i64: 8, 32>}]} {
    %c0 = arith.constant 0 : index
    %c0_0 = arith.constant 0 : index
    %0 = vector.load %arg1[%c0, %c0_0] : memref<8x32xf32, #tpu.memory_space<vmem>>, vector<8x32xf32>
    %c0_1 = arith.constant 0 : index
    %c0_2 = arith.constant 0 : index
    %1 = vector.load %arg2[%c0_1, %c0_2] : memref<32x32xf32, #tpu.memory_space<vmem>>, vector<32x32xf32>
    %cst = arith.constant dense<0.000000e+00> : vector<8x32xf32>
    %2 = tpu.matmul %0, %1, %cst {dimension_numbers = #tpu.dot_dimension_numbers<[1], [1], [0], [0], [0, 0, 1, 0], [], []>} : vector<8x32xf32>, vector<32x32xf32>, vector<8x32xf32> -> vector<8x32xf32>
    %c0_3 = arith.constant 0 : index
    %c0_4 = arith.constant 0 : index
    %3 = vector.load %arg3[%c0_3, %c0_4] : memref<1x32xf32, #tpu.memory_space<vmem>>, vector<1x32xf32>
    %4 = vector.broadcast %3 : vector<1x32xf32> to vector<8x32xf32>
    %5 = arith.addf %2, %4 : vector<8x32xf32>
    %cst_5 = arith.constant 0.594603539 : f32
    %6 = vector.broadcast %cst_5 : f32 to vector<8x32xf32>
    %7 = arith.mulf %5, %6 : vector<8x32xf32>
    %c0_6 = arith.constant 0 : index
    %c0_7 = arith.constant 0 : index
    %8 = vector.load %arg4[%c0_6, %c0_7] : memref<8x32xf32, #tpu.memory_space<vmem>>, vector<8x32xf32>
    tpu.vector_store %arg4[%c0_6, %c0_7], %7 {strides = array<i32>} : memref<8x32xf32, #tpu.memory_space<vmem>>, vector<8x32xf32>,
    return
  }
  func.func @transform_0(%arg0: i32) -> (i32, i32) {
    %c0_i32 = arith.constant 0 : i32
    %c0_i32_0 = arith.constant 0 : i32
    return %arg0, %c0_i32 : i32, i32
  }
  func.func @transform_1(%arg0: i32) -> (i32, i32) {
    %c0_i32 = arith.constant 0 : i32
    %c0_i32_0 = arith.constant 0 : i32
    %c0_i32_1 = arith.constant 0 : i32
    return %c0_i32, %c0_i32_0 : i32, i32
  }
  func.func @transform_2(%arg0: i32) -> (i32, i32) {
    %c0_i32 = arith.constant 0 : i32
    %c0_i32_0 = arith.constant 0 : i32
    %c0_i32_1 = arith.constant 0 : i32
    return %c0_i32, %c0_i32_0 : i32, i32
  }
  func.func @transform_3(%arg0: i32) -> (i32, i32) {
    %c0_i32 = arith.constant 0 : i32
    %c0_i32_0 = arith.constant 0 : i32
    return %arg0, %c0_i32 : i32, i32
  }
}

</mosaic_0001>

<llo_original>
// kernel: tpu_custom_call.1
$region0: #{tpu_custom_call.1}
  #allocation0 [shape = 'u32[]', space=smem, size = 0x4, offset = 0x4, fixed_abs, tag = 'smem constant byte address 0x4 - core index']
  #allocation1 [shape = 'u32[144,128]{1,0:T(1,128)}', space=vmem, size = 0x12000, scoped, tag = 'internal scratch']
  %s0 = inlined_call_operand.hbm [shape: f32[16,32], index: 0, kind: input, shape index: {}]
  %s1 = inlined_call_operand.hbm [shape: f32[32,32], index: 1, kind: input, shape index: {}]
  %s2 = inlined_call_operand.vmem [shape: f32[1,32], index: 2, kind: input, shape index: {}]
  %s3 = inlined_call_operand.hbm [shape: f32[16,32], index: 3, kind: output, shape index: {}]
  %s4 = sld [smem:[#allocation0]]
  $region53: #{tpu_custom_call.1} parent=0
    _
  %s6 = ssub.s32 1, %s4
  %s7 = scalar_select 0, %s6, %s4
  $region1: #{tpu_custom_call.1} parent=0
    #allocation2 [shape = 'u8[8192]{0}', space=vmem, size = 0x2000, scoped, tag = 'input window, operand 0']
    #allocation3 [shape = 's32[2]{0}', space=sflag, size = 0x8, scoped, tag = 'scoped memory for tpu_custom_call.1']
    #allocation4 [shape = 's32[2]{0}', space=sflag, size = 0x8, scoped, tag = 'scoped memory for tpu_custom_call.1']
    #allocation5 [shape = 'u8[16384]{0}', space=vmem, size = 0x4000, scoped, tag = 'input window, operand 1, single buffered']
    #allocation6 [shape = 's32[1]{0}', space=sflag, size = 0x4, scoped, tag = 'scoped memory for tpu_custom_call.1']
    #allocation7 [shape = 'u8[8192]{0}', space=vmem, size = 0x2000, scoped, tag = 'output window, operand 0']
    %8 = vsyncpa [#allocation3], 0
    %s9 = scalar_lea.sflag [#allocation3], 1
    %10 = vsyncpa %s9, 0
    %11 = vsyncpa [#allocation6], 0
    %12 = vsyncpa [#allocation4], 0
    %s13 = scalar_lea.sflag [#allocation4], 1
    %14 = vsyncpa %s13, 0
    loop: start=0, step=1, limit=4
    $region2: #{tpu_custom_call.1} parent=1 // loop_pre_header
      _
    $region3: #{tpu_custom_call.1} parent=1 // loop_header
      %s16 = sphi 0, %s20
      %p17 = scmp.ge.s32.totalorder %s16, 4
      %s26 = sphi 0, %s28
      %s29 = sphi 0, %s26
      %s30 = sphi 0, %s29
      %s46 = sphi 0, %s30
      %s50 = sphi 0, %s50
      %s52 = sphi 0, %s50
      %s53 = sphi 0, %s52
      %s67 = sphi 0, %s53
      %s71 = sphi 0, %s71
      %s73 = sphi 0, %s71
      %s74 = sphi 0, %s73
      %s88 = sphi 0, %s74
      %s94 = sphi 0, %s96
      %s97 = sphi 0, %s94
      %s98 = sphi 0, %s97
      %s114 = sphi 0, %s98
    $region4: #{tpu_custom_call.1} parent=1 // loop_header_branch
      %19 = sbr.rel (%p17) target = $region8
    $region5: #{tpu_custom_call.1} parent=1 // loop_body
      %s21 = ssub.s32 %s16, 1
      %s22 = ssub.s32 %s16, 2
      %s23 = sadd.s32 %s16, 1
      %s24 = ssub.s32 %s16, %s23
      %p25 = scmp.eq.s32.totalorder %s24, 0
      %s27 = sadd.s32 %s26, 1
      %s28 = scalar_select %p25, %s26, %s27
      %p31 = pneg %p25
      %p32 = scmp.eq.s32.totalorder %s16, 1
      %p33 = por %p31, %p32
      %p34 = scmp.ne.s32.totalorder %s26, %s29
      %p35 = scmp.eq.s32.totalorder %s16, 0
      %p36 = por %p34, %p35
      %p37 = scmp.ne.s32.totalorder %s26, %s29
      %p38 = scmp.eq.s32.totalorder %s21, 1
      %p39 = por %p37, %p38
      %p40 = scmp.ne.s32.totalorder %s29, %s30
      %p41 = scmp.eq.s32.totalorder %s21, 0
      %p42 = por %p40, %p41
      %p43 = scmp.ne.s32.totalorder %s29, %s30
      %p44 = scmp.eq.s32.totalorder %s22, 1
      %p45 = por %p43, %p44
      %p47 = scmp.ne.s32.totalorder %s30, %s46
      %p48 = scmp.eq.s32.totalorder %s22, 0
      %p49 = por %p47, %p48
      %s51 = sadd.s32 %s50, 1
      %p54 = scmp.eq.s32.totalorder %s16, 1
      %p55 = scmp.ne.s32.totalorder %s50, %s52
      %p56 = scmp.eq.s32.totalorder %s16, 0
      %p57 = por %p55, %p56
      %p58 = scmp.ne.s32.totalorder %s50, %s52
      %p59 = scmp.eq.s32.totalorder %s21, 1
      %p60 = por %p58, %p59
      %p61 = scmp.ne.s32.totalorder %s52, %s53
      %p62 = scmp.eq.s32.totalorder %s21, 0
      %p63 = por %p61, %p62
      %p64 = scmp.ne.s32.totalorder %s52, %s53
      %p65 = scmp.eq.s32.totalorder %s22, 1
      %p66 = por %p64, %p65
      %p68 = scmp.ne.s32.totalorder %s53, %s67
      %p69 = scmp.eq.s32.totalorder %s22, 0
      %p70 = por %p68, %p69
      %s72 = sadd.s32 %s71, 1
      %p75 = scmp.eq.s32.totalorder %s16, 1
      %p76 = scmp.ne.s32.totalorder %s71, %s73
      %p77 = scmp.eq.s32.totalorder %s16, 0
      %p78 = por %p76, %p77
      %p79 = scmp.ne.s32.totalorder %s71, %s73
      %p80 = scmp.eq.s32.totalorder %s21, 1
      %p81 = por %p79, %p80
      %p82 = scmp.ne.s32.totalorder %s73, %s74
      %p83 = scmp.eq.s32.totalorder %s21, 0
      %p84 = por %p82, %p83
      %p85 = scmp.ne.s32.totalorder %s73, %s74
      %p86 = scmp.eq.s32.totalorder %s22, 1
      %p87 = por %p85, %p86
      %p89 = scmp.ne.s32.totalorder %s74, %s88
      %p90 = scmp.eq.s32.totalorder %s22, 0
      %p91 = por %p89, %p90
      %s92 = ssub.s32 %s16, %s23
      %p93 = scmp.eq.s32.totalorder %s92, 0
      %s95 = sadd.s32 %s94, 1
      %s96 = scalar_select %p93, %s94, %s95
      %p99 = pneg %p93
      %p100 = scmp.eq.s32.totalorder %s16, 1
      %p101 = por %p99, %p100
      %p102 = scmp.ne.s32.totalorder %s94, %s97
      %p103 = scmp.eq.s32.totalorder %s16, 0
      %p104 = por %p102, %p103
      %p105 = scmp.ne.s32.totalorder %s94, %s97
      %p106 = scmp.eq.s32.totalorder %s21, 1
      %p107 = por %p105, %p106
      %p108 = scmp.ne.s32.totalorder %s97, %s98
      %p109 = scmp.eq.s32.totalorder %s21, 0
      %p110 = por %p108, %p109
      %p111 = scmp.ne.s32.totalorder %s97, %s98
      %p112 = scmp.eq.s32.totalorder %s22, 1
      %p113 = por %p111, %p112
      %p115 = scmp.ne.s32.totalorder %s98, %s114
      %p116 = scmp.eq.s32.totalorder %s22, 0
      %p117 = por %p115, %p116
      %p118 = scmp.le.s32.totalorder 1, %s16
      %p119 = scmp.lt.s32.totalorder %s16, 3
      %p120 = pnand %p118, %p119
      %p121 = pneg %p120
      // Predicated region
      $region9: #{tpu_custom_call.1} parent=5 // pred_check
        _
      $region10: #{tpu_custom_call.1} parent=5 // pred_check_branch
        %123 = sbr.rel (%p120) target = $region12
      $region11: #{tpu_custom_call.1} parent=5 // pred_region
        %s124 = ssub.s32 %s16, 1
        // Predicated region
        $region13: #{tpu_custom_call.1} parent=11 // pred_check
          %p125 = pneg %p63
        $region14: #{tpu_custom_call.1} parent=11 // pred_check_branch
          %127 = sbr.rel (%p125) target = $region16
        $region15: #{tpu_custom_call.1} parent=11 // pred_region
          %s129 = ssub.s32 512, 512
          %130 = vsyncadd [#allocation6], %s129
          %s131 = sshll.u32 [#allocation5], 4
          %s132 = int_to_ptr.vmem [resolvable:$true] %s131
          %137 = dma.hbm_to_vmem [thread:$0]  %s1, 512, %s132, [#allocation6], 128, 128, 8
        $region16: #{tpu_custom_call.1} parent=11 // pred_fallthru
          _
        // Predicated region
        $region17: #{tpu_custom_call.1} parent=11 // pred_check
          %p138 = pneg %p84
        $region18: #{tpu_custom_call.1} parent=11 // pred_check_branch
          %140 = sbr.rel (%p138) target = $region20
        $region19: #{tpu_custom_call.1} parent=11 // pred_region
          _
        $region20: #{tpu_custom_call.1} parent=11 // pred_fallthru
          _
      $region12: #{tpu_custom_call.1} parent=5 // pred_fallthru
        _
      %p141 = scmp.lt.s32.totalorder %s16, 2
      // Predicated region
      $region21: #{tpu_custom_call.1} parent=5 // pred_check
        %p142 = pneg %p141
      $region22: #{tpu_custom_call.1} parent=5 // pred_check_branch
        %144 = sbr.rel (%p142) target = $region24
      $region23: #{tpu_custom_call.1} parent=5 // pred_region
        // Predicated region
        $region25: #{tpu_custom_call.1} parent=23 // pred_check
          %p145 = pneg %p36
        $region26: #{tpu_custom_call.1} parent=23 // pred_check_branch
          %147 = sbr.rel (%p145) target = $region28
        $region27: #{tpu_custom_call.1} parent=23 // pred_region
          %s148 = sand.u32 %s26, 1
          %s149 = scalar_lea.sflag [#allocation3], %s148
          %s150 = sand.u32 %s26, 1
          %s151 = smul.addr %s150, 8
          %s152 = scalar_lea.vmem [#allocation2], %s151
          %s154 = ssub.s32 128, 128
          %155 = vsyncadd %s149, %s154
          %s156 = smul.addr %s16, 128
          %s157 = scalar_lea.hbm %s0, %s156
          %s159 = sshll.u32 %s152, 4
          %s160 = int_to_ptr.vmem [resolvable:$true] %s159
          %162 = dma.hbm_to_vmem [thread:$0]  %s157, 128, %s160, %s149
        $region28: #{tpu_custom_call.1} parent=23 // pred_fallthru
          _
      $region24: #{tpu_custom_call.1} parent=5 // pred_fallthru
        _
      %p163 = scmp.le.s32.totalorder 1, %s16
      %p164 = scmp.lt.s32.totalorder %s16, 3
      %p165 = pnand %p163, %p164
      %p166 = pneg %p165
      // Predicated region
      $region29: #{tpu_custom_call.1} parent=5 // pred_check
        _
      $region30: #{tpu_custom_call.1} parent=5 // pred_check_branch
        %168 = sbr.rel (%p165) target = $region32
      $region31: #{tpu_custom_call.1} parent=5 // pred_region
        %s169 = ssub.s32 %s16, 1
        %s170 = sand.u32 %s29, 1
        %s171 = scalar_lea.sflag [#allocation3], %s170
        %s172 = sand.u32 %s29, 1
        %s173 = smul.addr %s172, 8
        %s174 = scalar_lea.vmem [#allocation2], %s173
        // Predicated region
        $region33: #{tpu_custom_call.1} parent=31 // pred_check
          %p175 = pneg %p42
        $region34: #{tpu_custom_call.1} parent=31 // pred_check_branch
          %177 = sbr.rel (%p175) target = $region36
        $region35: #{tpu_custom_call.1} parent=31 // pred_region
          %178 = dma.done %s171, 128
        $region36: #{tpu_custom_call.1} parent=31 // pred_fallthru
          _
        // Predicated region
        $region37: #{tpu_custom_call.1} parent=31 // pred_check
          %p179 = pneg %p63
        $region38: #{tpu_custom_call.1} parent=31 // pred_check_branch
          %181 = sbr.rel (%p179) target = $region40
        $region39: #{tpu_custom_call.1} parent=31 // pred_region
          %182 = dma.done [#allocation6], 512
        $region40: #{tpu_custom_call.1} parent=31 // pred_fallthru
          _
        %s183 = sand.u32 %s29, 1
        %s184 = scalar_lea.sflag [#allocation3], %s183
        %s185 = sand.u32 %s29, 1
        %s186 = smul.addr %s185, 8
        %s187 = scalar_lea.vmem [#allocation2], %s186
        %p188 = pneg %p42
        %p189 = pneg %p39
        %p190 = pneg %p63
        %p191 = pneg %p60
        %p192 = pneg %p84
        %p193 = pneg %p81
        %p194 = pneg %p110
        %p195 = pneg %p107
        %s196 = sand.u32 %s97, 1
        %s197 = scalar_lea.sflag [#allocation4], %s196
        %s198 = sand.u32 %s97, 1
        %s199 = smul.addr %s198, 8
        %s200 = scalar_lea.vmem [#allocation7], %s199
        %v201 = vld [vmem:[%s174] sm:$0xff]
        %v202 = vld [vmem:[#allocation5] sm:$0xff]
        %v203 = vld [vmem:[#allocation5 + $0x8] sm:$0xff]
        %v204 = vld [vmem:[#allocation5 + $0x10] sm:$0xff]
        %v205 = vld [vmem:[#allocation5 + $0x18] sm:$0xff]
        %v206 = vld [vmem:[%s2] sm:$0x1]
        %v208 = vlaneseq
        %v209 = vshrl.u32 %v208, 7
        %v210 = vsub.s32 0, %v209
        %v211 = vrot.slane %v206, %v210
        %vm213 = vcmask 261120
        %v215 = vsel %vm213, %v201, 0
        %v218 = vsel %vm213, %v202, 0
        %v221 = vsel %vm213, %v203, 0
        %v224 = vsel %vm213, %v204, 0
        %v227 = vsel %vm213, %v205, 0
        %229 = vmatprep.subr.mxu0 0.0
        %230 = vmatpush1.xpose.msra.mxu0 0.0
        %231 = vmatprep.subr.mxu0 0.0
        %232 = vmatpush1.xpose.msra.mxu0 0.0
        %233 = vmatprep.subr.mxu0 0.0
        %234 = vmatpush1.xpose.msra.mxu0 0.0
        %235 = vmatprep.subr.mxu0 0.0
        %236 = vmatpush1.xpose.msra.mxu0 0.0
        %237 = vmatprep.subr.mxu0 0.0
        %238 = vmatpush1.xpose.msra.mxu0 0.0
        %239 = vmatprep.subr.mxu0 0.0
        %240 = vmatpush1.xpose.msra.mxu0 0.0
        %241 = vmatprep.subr.mxu0 0.0
        %242 = vmatpush1.xpose.msra.mxu0 0.0
        %243 = vmatprep.subr.mxu0 0.0
        %244 = vmatpush1.xpose.msra.mxu0 0.0
        %245 = vmatprep.subr.mxu0 0.0
        %246 = vmatpush1.xpose.msra.mxu0 0.0
        %247 = vmatprep.subr.mxu0 0.0
        %248 = vmatpush1.xpose.msra.mxu0 0.0
        %249 = vmatprep.subr.mxu0 0.0
        %250 = vmatpush1.xpose.msra.mxu0 0.0
        %251 = vmatprep.subr.mxu0 0.0
        %252 = vmatpush1.xpose.msra.mxu0 0.0
        %253 = vmatprep.subr.mxu0 0.0
        %254 = vmatpush1.xpose.msra.mxu0 %v227
        %255 = vmatprep.subr.mxu0 0.0
        %256 = vmatpush1.xpose.msra.mxu0 %v224
        %257 = vmatprep.subr.mxu0 0.0
        %258 = vmatpush1.xpose.msra.mxu0 %v221
        %259 = vmatprep.subr.mxu0 0.0
        %260 = vmatpush1.xpose.msra.mxu0 %v218
        %261 = vmatprep.subr.mxu0 0.0
        %262 = vmatpush2.xpose.msra.mxu0 0.0
        %263 = vmatprep.subr.mxu0 0.0
        %264 = vmatpush2.xpose.msra.mxu0 0.0
        %265 = vmatprep.subr.mxu0 0.0
        %266 = vmatpush2.xpose.msra.mxu0 0.0
        %267 = vmatprep.subr.mxu0 0.0
        %268 = vmatpush2.xpose.msra.mxu0 0.0
        %269 = vmatprep.subr.mxu0 0.0
        %270 = vmatpush2.xpose.msra.mxu0 0.0
        %271 = vmatprep.subr.mxu0 0.0
        %272 = vmatpush2.xpose.msra.mxu0 0.0
        %273 = vmatprep.subr.mxu0 0.0
        %274 = vmatpush2.xpose.msra.mxu0 0.0
        %275 = vmatprep.subr.mxu0 0.0
        %276 = vmatpush2.xpose.msra.mxu0 0.0
        %277 = vmatprep.subr.mxu0 0.0
        %278 = vmatpush2.xpose.msra.mxu0 0.0
        %279 = vmatprep.subr.mxu0 0.0
        %280 = vmatpush2.xpose.msra.mxu0 0.0
        %281 = vmatprep.subr.mxu0 0.0
        %282 = vmatpush2.xpose.msra.mxu0 0.0
        %283 = vmatprep.subr.mxu0 0.0
        %284 = vmatpush2.xpose.msra.mxu0 0.0
        %285 = vmatprep.subr.mxu0 0.0
        %286 = vmatpush2.xpose.msra.mxu0 0.0
        %287 = vmatprep.subr.mxu0 0.0
        %288 = vmatpush2.xpose.msra.mxu0 0.0
        %289 = vmatprep.subr.mxu0 0.0
        %290 = vmatpush2.xpose.msra.mxu0 0.0
        %291 = vmatprep.subr.mxu0 0.0
        %292 = vmatpush2.xpose.msra.mxu0 0.0
        %293 = vmatprep.mubr.f32.mxu0 0.0
        %294 = vmatmul.mubr.f32.gmra.mxu0 %v215
        %v295 = vpop.f32.mrf.mxu0
        %v296 = vadd.f32 %v211, %v295
        %v297 = vpop.f32.mrf.mxu0
        %298 = vdwg.mxu0
        %v299 = vmul.f32 %v296, 0.59460354
        %300 = vst.msk [vmem:[%s200] sm:$0xff] %vm213, %v299
        %s301 = sand.u32 %s97, 1
        %s302 = scalar_lea.sflag [#allocation4], %s301
        %s303 = sand.u32 %s97, 1
        %s304 = smul.addr %s303, 8
        %s305 = scalar_lea.vmem [#allocation7], %s304
        // Predicated region
        $region41: #{tpu_custom_call.1} parent=31 // pred_check
          %p306 = pneg %p107
        $region42: #{tpu_custom_call.1} parent=31 // pred_check_branch
          %308 = sbr.rel (%p306) target = $region44
        $region43: #{tpu_custom_call.1} parent=31 // pred_region
          %s310 = ssub.s32 128, 128
          %311 = vsyncadd %s302, %s310
          %s312 = smul.addr %s21, 128
          %s313 = scalar_lea.hbm %s3, %s312
          %s315 = sshll.u32 %s305, 4
          %s316 = int_to_ptr.vmem [resolvable:$true] %s315
          %318 = dma.vmem_to_hbm [thread:$0]  %s316, 128, %s313, %s302
        $region44: #{tpu_custom_call.1} parent=31 // pred_fallthru
          _
      $region32: #{tpu_custom_call.1} parent=5 // pred_fallthru
        _
      %p319 = scmp.le.s32.totalorder 2, %s16
      // Predicated region
      $region45: #{tpu_custom_call.1} parent=5 // pred_check
        %p320 = pneg %p319
      $region46: #{tpu_custom_call.1} parent=5 // pred_check_branch
        %322 = sbr.rel (%p320) target = $region48
      $region47: #{tpu_custom_call.1} parent=5 // pred_region
        %s323 = ssub.s32 %s16, 2
        // Predicated region
        $region49: #{tpu_custom_call.1} parent=47 // pred_check
          %p324 = pneg %p113
        $region50: #{tpu_custom_call.1} parent=47 // pred_check_branch
          %326 = sbr.rel (%p324) target = $region52
        $region51: #{tpu_custom_call.1} parent=47 // pred_region
          %s327 = sand.u32 %s98, 1
          %s328 = scalar_lea.sflag [#allocation4], %s327
          %s329 = sand.u32 %s98, 1
          %s330 = smul.addr %s329, 8
          %s331 = scalar_lea.vmem [#allocation7], %s330
          %332 = dma.done %s328, 128
        $region52: #{tpu_custom_call.1} parent=47 // pred_fallthru
          _
      $region48: #{tpu_custom_call.1} parent=5 // pred_fallthru
        _
    $region6: #{tpu_custom_call.1} parent=1 // loop_footer
      %s20 = sadd.s32 1, %s16
    $region7: #{tpu_custom_call.1} parent=1 // loop_footer_branch
      %15 = sbr.rel target = $region3
    $region8: #{tpu_custom_call.1} parent=1 // loop_exit
      _
    %333 = vsyncpa [#allocation3], 1
    %s334 = scalar_lea.sflag [#allocation3], 1
    %335 = vsyncpa %s334, 1
    %336 = vsyncpa [#allocation6], 1
    %337 = vsyncpa [#allocation4], 1
    %s338 = scalar_lea.sflag [#allocation4], 1
    %339 = vsyncpa %s338, 1

</llo_original>
